<compile_context>
chip_gen: v7x
topology: tpu7x:2x2x1
jax: 0.10.0
libtpu: 0.0.40
codegen_flags: <defaults>
</compile_context>

<pallas_src>
import functools

import jax
import jax.numpy as jnp
from jax.experimental import pallas as pl
from jax.experimental.pallas import tpu as pltpu

_LANES = 128


def _se_gate_kernel(x_ref, w_avg_t_ref, w_max_t_ref, w_fc1_t_ref, w_fc2_t_ref,
                    gate_ref, sum_acc, max_acc, *,
                    inv_hw, hw, hwt, lane_path, mask_tail):
    """Grid = (batch tiles, HW tiles). Writes the (bt, C) gate at the last HW tile.

    NOTE: when B % bt != 0 the last batch tile contains undefined padded rows;
    they may produce -inf/NaN intermediates, but every op here is row-independent
    and the masked output store drops those rows, so valid rows are unaffected.
    Do NOT "fix" this by removing the -inf max init.
    """
    k = pl.program_id(1)

    @pl.when(k == 0)
    def _init():
        sum_acc[...] = jnp.zeros_like(sum_acc)
        max_acc[...] = jnp.full_like(max_acc, -jnp.inf)

    x = x_ref[...].astype(jnp.float32)            # (bt, C, hwt); upcast if bf16

    if mask_tail:
        # Last HW tile is ragged: neutralize padded lanes (0 for sum, -inf for
        # max). On non-last steps rem >= hwt, so the mask is all-true (no-op).
        rem = hw - k * hwt
        pos = jax.lax.broadcasted_iota(jnp.int32, (1, 1, hwt), 2)
        valid = pos < rem
        xs = jnp.where(valid, x, 0.0)
        xm = jnp.where(valid, x, -jnp.inf)
    else:
        xs = x
        xm = x

    if lane_path:
        # Lane-dense accumulation: fold hwt into a 128-lane running sum/max
        # with pure VPU adds/maxes; the cross-lane reduce happens only once,
        # inside the finalize below.
        n = hwt // _LANES
        ps = xs[:, :, 0:_LANES]
        pm = xm[:, :, 0:_LANES]
        for j in range(1, n):
            sl = slice(j * _LANES, (j + 1) * _LANES)
            ps = ps + xs[:, :, sl]
            pm = jnp.maximum(pm, xm[:, :, sl])
        sum_acc[...] += ps
        max_acc[...] = jnp.maximum(max_acc[...], pm)
    else:
        # hwt not a multiple of 128 only happens on the single-step full-extent
        # path, so the per-step cross-lane reduce is paid exactly once.
        sum_acc[...] += jnp.sum(xs, axis=-1)
        max_acc[...] = jnp.maximum(max_acc[...], jnp.max(xm, axis=-1))

    @pl.when(k == pl.num_programs(1) - 1)
    def _finalize():
        if lane_path:
            y_sum = jnp.sum(sum_acc[...], axis=-1)       # single XLU reduce
            y_max = jnp.max(max_acc[...], axis=-1)
        else:
            y_sum = sum_acc[...]
            y_max = max_acc[...]
        y_avg = y_sum * inv_hw                            # AdaptiveAvgPool2d(1)
        # conv1x1(cat([avg, max], dim=1)) == avg @ W[:, :C].T + max @ W[:, C:].T
        y = (jnp.dot(y_avg, w_avg_t_ref[...], preferred_element_type=jnp.float32)
             + jnp.dot(y_max, w_max_t_ref[...], preferred_element_type=jnp.float32))
        # fc: Linear(C, C//r) -> ReLU -> Linear(C//r, C) -> Sigmoid  (no biases)
        h = jnp.maximum(
            jnp.dot(y, w_fc1_t_ref[...], preferred_element_type=jnp.float32), 0.0)
        g = jnp.dot(h, w_fc2_t_ref[...], preferred_element_type=jnp.float32)
        gate_ref[...] = jax.nn.sigmoid(g).astype(gate_ref.dtype)


def _vmem_capacity_bytes():
    try:
        cap = getattr(pltpu.get_tpu_info(), "vmem_capacity_bytes", None)
        if cap:
            return int(cap)
    except Exception:
        pass
    return 128 * 1024 * 1024   # v5e/v6e default if the query is unavailable


def _pick_batch_tile(b):
    # Output gate block is (bt, C): bt must be a multiple of 8 or equal to B.
    if b <= 8:
        return b
    # Keep >= 2 batch tiles so the "parallel" axis can shard across both v7x
    # TensorCores; cap at 32 so accumulators / x blocks stay modest.
    bt = (b // 2) // 8 * 8
    return max(8, min(32, bt))


def _pick_hw_tile(hw, bt, c, elem_bytes, block_budget_bytes):
    """HW tile = last dim of the x block.

    Either the full hw (single reduction step) or a multiple of 128 sized to
    the VMEM budget; the last grid step may then be ragged and is masked
    in-kernel, so no exact-divisor requirement on hw.
    """
    max_hw = block_budget_bytes // max(1, bt * c * elem_bytes)
    if hw <= max(max_hw, _LANES):
        return hw                               # one step over the full extent
    hwt = (min(max_hw, hw) // _LANES) * _LANES
    # >= 2 KiB contiguous per strided DMA row (matters most on v5e).
    floor = 512 if hw >= 512 else _LANES
    return max(hwt, floor)


def se_layer(x, w_conv, w_fc1, w_fc2, *, block_budget_bytes=None):
    """x: (B, C, H, W) f32 or bf16.
       w_conv: (C, 2C)   -- Conv2d(2C, C, 1, bias=False) weight (squeezed).
       w_fc1:  (C//r, C) -- Linear(C, C//r, bias=False) weight.
       w_fc2:  (C, C//r) -- Linear(C//r, C, bias=False) weight."""
    b, c, h, w = x.shape
    hw = h * w
    hid = w_fc1.shape[0]
    x3 = x.reshape(b, c, hw)

    # Pre-split + pre-transpose the 1x1-conv weight (removes in-kernel concat).
    w_avg_t = jnp.asarray(w_conv[:, :c].T, jnp.float32)   # (C, C) on avg half
    w_max_t = jnp.asarray(w_conv[:, c:].T, jnp.float32)   # (C, C) on max half
    w_fc1_t = jnp.asarray(w_fc1.T, jnp.float32)            # (C, C//r)
    w_fc2_t = jnp.asarray(w_fc2.T, jnp.float32)            # (C//r, C)

    capacity = _vmem_capacity_bytes()
    if block_budget_bytes is None:
        # ~16 MiB x blocks on v5e/v6e (128 MiB VMEM), ~8 MiB on v7x (64 MiB).
        block_budget_bytes = min(16 << 20, capacity // 8)

    elem = jnp.dtype(x.dtype).itemsize
    bt = _pick_batch_tile(b)
    hwt = _pick_hw_tile(hw, bt, c, elem, block_budget_bytes)
    lane_path = (hwt % _LANES == 0)
    mask_tail = (hw % hwt) != 0
    grid = (pl.cdiv(b, bt), pl.cdiv(hw, hwt))

    # Size the VMEM limit from the actual blocks (double-buffered) + headroom,
    # and keep it inside the chip's capacity (64 MiB/TC on v7x).
    acc_lanes = _LANES if lane_path else 1
    x_block_bytes = bt * c * hwt * elem
    w_block_bytes = 4 * int(w_avg_t.size + w_max_t.size + w_fc1_t.size + w_fc2_t.size)
    acc_bytes = 2 * bt * c * acc_lanes * 4
    out_block_bytes = bt * c * elem
    need = 2 * (x_block_bytes + w_block_bytes + out_block_bytes) + acc_bytes + (4 << 20)
    vmem_limit = int(min(max(need, 32 << 20), capacity - (8 << 20)))

    kernel = functools.partial(
        _se_gate_kernel, inv_hw=1.0 / hw, hw=hw, hwt=hwt,
        lane_path=lane_path, mask_tail=mask_tail)

    acc_shape = (bt, c, acc_lanes) if lane_path else (bt, c)

    gate = pl.pallas_call(
        kernel,
        out_shape=jax.ShapeDtypeStruct((b, c), x.dtype),
        grid_spec=pltpu.PrefetchScalarGridSpec(
            num_scalar_prefetch=0,
            grid=grid,
            in_specs=[
                pl.BlockSpec((bt, c, hwt), lambda i, k: (i, 0, k)),
                pl.BlockSpec((c, c), lambda i, k: (0, 0)),
                pl.BlockSpec((c, c), lambda i, k: (0, 0)),
                pl.BlockSpec((c, hid), lambda i, k: (0, 0)),
                pl.BlockSpec((hid, c), lambda i, k: (0, 0)),
            ],
            out_specs=pl.BlockSpec((bt, c), lambda i, k: (i, 0)),
            scratch_shapes=[
                pltpu.VMEM(acc_shape, jnp.float32),   # running sum
                pltpu.VMEM(acc_shape, jnp.float32),   # running max
            ],
        ),
        compiler_params=pltpu.CompilerParams(
            dimension_semantics=("parallel", "arbitrary"),
            vmem_limit_bytes=vmem_limit,
        ),
    )(x3, w_avg_t, w_max_t, w_fc1_t, w_fc2_t)

    # y.view(b, c, 1, 1).expand_as(x) -- done outside the kernel (fusable by XLA).
    return jnp.broadcast_to(gate[:, :, None, None], x.shape)


def se_layer_ref(x, w_conv, w_fc1, w_fc2):
    # Pure-JAX reference mirroring the PyTorch forward.
    xf = x.astype(jnp.float32)
    y_avg = xf.mean(axis=(2, 3))
    y_max = xf.max(axis=(2, 3))
    y = jnp.concatenate([y_avg, y_max], axis=1)
    y = y @ w_conv.T
    y = jnp.maximum(y @ w_fc1.T, 0.0)
    y = jax.nn.sigmoid(y @ w_fc2.T).astype(x.dtype)
    return jnp.broadcast_to(y[:, :, None, None], x.shape)


if __name__ == "__main__":
    reduction = 16

    def make_weights(key, c):
        hid = max(1, c // reduction)
        k1, k2, k3 = jax.random.split(key, 3)
        # Deterministic init matching __init__: normal(0, 0.02), no biases.
        w_conv = 0.02 * jax.random.normal(k1, (c, 2 * c), dtype=jnp.float32)
        w_fc1 = 0.02 * jax.random.normal(k2, (hid, c), dtype=jnp.float32)
        w_fc2 = 0.02 * jax.random.normal(k3, (c, hid), dtype=jnp.float32)
        return w_conv, w_fc1, w_fc2

    # (B, C, H, W, forced block budget or None for per-chip auto)
    cases = [
        (2, 32, 16, 16, None),        # lane-chunk path, single HW step
        (2, 32, 18, 18, 64 * 1024),   # multi-step HW tiling + ragged tail mask
        (10, 32, 14, 14, None),       # ragged batch tile + non-128 spatial size
    ]

    key = jax.random.PRNGKey(0)
    for (B, C, H, W, budget) in cases:
        key, kx, kw = jax.random.split(key, 3)
        x = jax.random.normal(kx, (B, C, H, W), dtype=jnp.float32)
        w_conv, w_fc1, w_fc2 = make_weights(kw, C)

        out = se_layer(x, w_conv, w_fc1, w_fc2, block_budget_bytes=budget)
        jax.block_until_ready(out)

        ref = se_layer_ref(x, w_conv, w_fc1, w_fc2)
        assert out.shape == x.shape
        assert jnp.allclose(out, ref, atol=1e-5, rtol=1e-5), \
            f"mismatch vs reference for shape {(B, C, H, W)}"

    print("KERNEL_OK")
</pallas_src>

<mosaic_0001>
module attributes {stable_mosaic.version = 11 : i64} {
  func.func @_se_gate_kernel(%arg0: i32, %arg1: i32, %arg2: memref<2x32x256xf32, #tpu.memory_space<vmem>>, %arg3: memref<32x32xf32, #tpu.memory_space<vmem>>, %arg4: memref<32x32xf32, #tpu.memory_space<vmem>>, %arg5: memref<32x2xf32, #tpu.memory_space<vmem>>, %arg6: memref<2x32xf32, #tpu.memory_space<vmem>>, %arg7: memref<2x32xf32, #tpu.memory_space<vmem>>, %arg8: memref<2x32x128xf32, #tpu.memory_space<vmem>>, %arg9: memref<2x32x128xf32, #tpu.memory_space<vmem>>) attributes {dimension_semantics = [#tpu.dimension_semantics<parallel>, #tpu.dimension_semantics<arbitrary>], iteration_bounds = array<i64: 1, 1>, scalar_prefetch = 0 : i64, scratch_operands = 2 : i64, tpu.core_type = #tpu.core_type<tc>, window_params = [{transform_indices = @transform_0, window_bounds = array<i64: 2, 32, 256>}, {pipeline_mode = #tpu.pipeline_mode<synchronous>, transform_indices = @transform_1, window_bounds = array<i64: 32, 32>}, {pipeline_mode = #tpu.pipeline_mode<synchronous>, transform_indices = @transform_2, window_bounds = array<i64: 32, 32>}, {pipeline_mode = #tpu.pipeline_mode<synchronous>, transform_indices = @transform_3, window_bounds = array<i64: 32, 2>}, {pipeline_mode = #tpu.pipeline_mode<synchronous>, transform_indices = @transform_4, window_bounds = array<i64: 2, 32>}, {transform_indices = @transform_5, window_bounds = array<i64: 2, 32>}]} {
    %c0_i32 = arith.constant 0 : i32
    %0 = arith.cmpi eq, %arg1, %c0_i32 : i32
    %1 = arith.extui %0 : i1 to i32
    %c0_i32_0 = arith.constant 0 : i32
    %2 = arith.cmpi ne, %1, %c0_i32_0 : i32
    scf.if %2 {
      %cst = arith.constant 0.000000e+00 : f32
      %19 = vector.broadcast %cst : f32 to vector<2x32x128xf32>
      %c0_17 = arith.constant 0 : index
      %c0_18 = arith.constant 0 : index
      %c0_19 = arith.constant 0 : index
      %20 = vector.load %arg8[%c0_17, %c0_18, %c0_19] : memref<2x32x128xf32, #tpu.memory_space<vmem>>, vector<2x32x128xf32>
      tpu.vector_store %arg8[%c0_17, %c0_18, %c0_19], %19 {strides = array<i32>} : memref<2x32x128xf32, #tpu.memory_space<vmem>>, vector<2x32x128xf32>,
      %cst_20 = arith.constant 0xFF800000 : f32
      %21 = vector.broadcast %cst_20 : f32 to vector<2x32x128xf32>
      %c0_21 = arith.constant 0 : index
      %c0_22 = arith.constant 0 : index
      %c0_23 = arith.constant 0 : index
      %22 = vector.load %arg9[%c0_21, %c0_22, %c0_23] : memref<2x32x128xf32, #tpu.memory_space<vmem>>, vector<2x32x128xf32>
      tpu.vector_store %arg9[%c0_21, %c0_22, %c0_23], %21 {strides = array<i32>} : memref<2x32x128xf32, #tpu.memory_space<vmem>>, vector<2x32x128xf32>,
    } else {
    }
    %c0 = arith.constant 0 : index
    %c0_1 = arith.constant 0 : index
    %c0_2 = arith.constant 0 : index
    %3 = vector.load %arg2[%c0, %c0_1, %c0_2] : memref<2x32x256xf32, #tpu.memory_space<vmem>>, vector<2x32x256xf32>
    %4 = vector.extract_strided_slice %3 {offsets = [0, 0, 0], sizes = [2, 32, 128], strides = [1, 1, 1]} : vector<2x32x256xf32> to vector<2x32x128xf32>
    %5 = vector.extract_strided_slice %3 {offsets = [0, 0, 0], sizes = [2, 32, 128], strides = [1, 1, 1]} : vector<2x32x256xf32> to vector<2x32x128xf32>
    %6 = vector.extract_strided_slice %3 {offsets = [0, 0, 128], sizes = [2, 32, 128], strides = [1, 1, 1]} : vector<2x32x256xf32> to vector<2x32x128xf32>
    %7 = arith.addf %4, %6 : vector<2x32x128xf32>
    %8 = vector.extract_strided_slice %3 {offsets = [0, 0, 128], sizes = [2, 32, 128], strides = [1, 1, 1]} : vector<2x32x256xf32> to vector<2x32x128xf32>
    %9 = arith.maximumf %5, %8 : vector<2x32x128xf32>
    %c0_3 = arith.constant 0 : index
    %c0_4 = arith.constant 0 : index
    %c0_5 = arith.constant 0 : index
    %10 = vector.load %arg8[%c0_3, %c0_4, %c0_5] : memref<2x32x128xf32, #tpu.memory_space<vmem>>, vector<2x32x128xf32>
    %11 = arith.addf %10, %7 : vector<2x32x128xf32>
    %c0_6 = arith.constant 0 : index
    %c0_7 = arith.constant 0 : index
    %c0_8 = arith.constant 0 : index
    %12 = vector.load %arg8[%c0_6, %c0_7, %c0_8] : memref<2x32x128xf32, #tpu.memory_space<vmem>>, vector<2x32x128xf32>
    tpu.vector_store %arg8[%c0_6, %c0_7, %c0_8], %11 {strides = array<i32>} : memref<2x32x128xf32, #tpu.memory_space<vmem>>, vector<2x32x128xf32>,
    %c0_9 = arith.constant 0 : index
    %c0_10 = arith.constant 0 : index
    %c0_11 = arith.constant 0 : index
    %13 = vector.load %arg9[%c0_9, %c0_10, %c0_11] : memref<2x32x128xf32, #tpu.memory_space<vmem>>, vector<2x32x128xf32>
    %14 = arith.maximumf %13, %9 : vector<2x32x128xf32>
    %c0_12 = arith.constant 0 : index
    %c0_13 = arith.constant 0 : index
    %c0_14 = arith.constant 0 : index
    %15 = vector.load %arg9[%c0_12, %c0_13, %c0_14] : memref<2x32x128xf32, #tpu.memory_space<vmem>>, vector<2x32x128xf32>
    tpu.vector_store %arg9[%c0_12, %c0_13, %c0_14], %14 {strides = array<i32>} : memref<2x32x128xf32, #tpu.memory_space<vmem>>, vector<2x32x128xf32>,
    %c0_i32_15 = arith.constant 0 : i32
    %16 = arith.cmpi eq, %arg1, %c0_i32_15 : i32
    %17 = arith.extui %16 : i1 to i32
    %c0_i32_16 = arith.constant 0 : i32
    %18 = arith.cmpi ne, %17, %c0_i32_16 : i32
    scf.if %18 {
      %c0_17 = arith.constant 0 : index
      %c0_18 = arith.constant 0 : index
      %c0_19 = arith.constant 0 : index
      %19 = vector.load %arg8[%c0_17, %c0_18, %c0_19] : memref<2x32x128xf32, #tpu.memory_space<vmem>>, vector<2x32x128xf32>
      %cst = arith.constant dense<0.000000e+00> : vector<2x32xf32>
      %20 = vector.multi_reduction <add>, %19, %cst [2] : vector<2x32x128xf32> to vector<2x32xf32>
      %c0_20 = arith.constant 0 : index
      %c0_21 = arith.constant 0 : index
      %c0_22 = arith.constant 0 : index
      %21 = vector.load %arg9[%c0_20, %c0_21, %c0_22] : memref<2x32x128xf32, #tpu.memory_space<vmem>>, vector<2x32x128xf32>
      %cst_23 = arith.constant dense<0xFF800000> : vector<2x32xf32>
      %22 = vector.multi_reduction <maximumf>, %21, %cst_23 [2] : vector<2x32x128xf32> to vector<2x32xf32>
      %cst_24 = arith.constant 3.906250e-03 : f32
      %23 = vector.broadcast %cst_24 : f32 to vector<2x32xf32>
      %24 = arith.mulf %20, %23 : vector<2x32xf32>
      %c0_25 = arith.constant 0 : index
      %c0_26 = arith.constant 0 : index
      %25 = vector.load %arg3[%c0_25, %c0_26] : memref<32x32xf32, #tpu.memory_space<vmem>>, vector<32x32xf32>
      %cst_27 = arith.constant dense<0.000000e+00> : vector<2x32xf32>
      %26 = tpu.matmul %24, %25, %cst_27 {dimension_numbers = #tpu.dot_dimension_numbers<[1], [0], [0], [1], [0, 0, 1, 1], [], []>} : vector<2x32xf32>, vector<32x32xf32>, vector<2x32xf32> -> vector<2x32xf32>
      %c0_28 = arith.constant 0 : index
      %c0_29 = arith.constant 0 : index
      %27 = vector.load %arg4[%c0_28, %c0_29] : memref<32x32xf32, #tpu.memory_space<vmem>>, vector<32x32xf32>
      %cst_30 = arith.constant dense<0.000000e+00> : vector<2x32xf32>
      %28 = tpu.matmul %22, %27, %cst_30 {dimension_numbers = #tpu.dot_dimension_numbers<[1], [0], [0], [1], [0, 0, 1, 1], [], []>} : vector<2x32xf32>, vector<32x32xf32>, vector<2x32xf32> -> vector<2x32xf32>
      %29 = arith.addf %26, %28 : vector<2x32xf32>
      %c0_31 = arith.constant 0 : index
      %c0_32 = arith.constant 0 : index
      %30 = vector.load %arg5[%c0_31, %c0_32] : memref<32x2xf32, #tpu.memory_space<vmem>>, vector<32x2xf32>
      %cst_33 = arith.constant dense<0.000000e+00> : vector<2x2xf32>
      %31 = tpu.matmul %29, %30, %cst_33 {dimension_numbers = #tpu.dot_dimension_numbers<[1], [0], [0], [1], [0, 0, 1, 1], [], []>} : vector<2x32xf32>, vector<32x2xf32>, vector<2x2xf32> -> vector<2x2xf32>
      %cst_34 = arith.constant 0.000000e+00 : f32
      %32 = vector.broadcast %cst_34 : f32 to vector<2x2xf32>
      %33 = arith.maximumf %31, %32 : vector<2x2xf32>
      %c0_35 = arith.constant 0 : index
      %c0_36 = arith.constant 0 : index
      %34 = vector.load %arg6[%c0_35, %c0_36] : memref<2x32xf32, #tpu.memory_space<vmem>>, vector<2x32xf32>
      %cst_37 = arith.constant dense<0.000000e+00> : vector<2x32xf32>
      %35 = tpu.matmul %33, %34, %cst_37 {dimension_numbers = #tpu.dot_dimension_numbers<[1], [0], [0], [1], [0, 0, 1, 1], [], []>} : vector<2x2xf32>, vector<2x32xf32>, vector<2x32xf32> -> vector<2x32xf32>
      %36 = arith.negf %35 : vector<2x32xf32>
      %37 = math.exp %36 : vector<2x32xf32>
      %cst_38 = arith.constant 1.000000e+00 : f32
      %38 = vector.broadcast %cst_38 : f32 to vector<2x32xf32>
      %39 = arith.addf %38, %37 : vector<2x32xf32>
      %40 = arith.divf %38, %39 : vector<2x32xf32>
      %c0_39 = arith.constant 0 : index
      %c0_40 = arith.constant 0 : index
      %41 = vector.load %arg7[%c0_39, %c0_40] : memref<2x32xf32, #tpu.memory_space<vmem>>, vector<2x32xf32>
      tpu.vector_store %arg7[%c0_39, %c0_40], %40 {strides = array<i32>} : memref<2x32xf32, #tpu.memory_space<vmem>>, vector<2x32xf32>,
    } else {
    }
    return
  }
  func.func @transform_0(%arg0: i32, %arg1: i32) -> (i32, i32, i32) {
    %c0_i32 = arith.constant 0 : i32
    %c0_i32_0 = arith.constant 0 : i32
    return %arg0, %c0_i32, %arg1 : i32, i32, i32
  }
  func.func @transform_1(%arg0: i32, %arg1: i32) -> (i32, i32) {
    %c0_i32 = arith.constant 0 : i32
    %c0_i32_0 = arith.constant 0 : i32
    %c0_i32_1 = arith.constant 0 : i32
    return %c0_i32, %c0_i32_0 : i32, i32
  }
  func.func @transform_2(%arg0: i32, %arg1: i32) -> (i32, i32) {
    %c0_i32 = arith.constant 0 : i32
    %c0_i32_0 = arith.constant 0 : i32
    %c0_i32_1 = arith.constant 0 : i32
    return %c0_i32, %c0_i32_0 : i32, i32
  }
  func.func @transform_3(%arg0: i32, %arg1: i32) -> (i32, i32) {
    %c0_i32 = arith.constant 0 : i32
    %c0_i32_0 = arith.constant 0 : i32
    %c0_i32_1 = arith.constant 0 : i32
    return %c0_i32, %c0_i32_0 : i32, i32
  }
  func.func @transform_4(%arg0: i32, %arg1: i32) -> (i32, i32) {
    %c0_i32 = arith.constant 0 : i32
    %c0_i32_0 = arith.constant 0 : i32
    %c0_i32_1 = arith.constant 0 : i32
    return %c0_i32, %c0_i32_0 : i32, i32
  }
  func.func @transform_5(%arg0: i32, %arg1: i32) -> (i32, i32) {
    %c0_i32 = arith.constant 0 : i32
    %c0_i32_0 = arith.constant 0 : i32
    return %arg0, %c0_i32 : i32, i32
  }
}

</mosaic_0001>

<llo_original>
// kernel: tpu_custom_call.1
$region0: #{tpu_custom_call.1}
  #allocation0 [shape = 'u32[]', space=smem, size = 0x4, offset = 0x4, fixed_abs, tag = 'smem constant byte address 0x4 - core index']
  #allocation1 [shape = 'u32[144,128]{1,0:T(1,128)}', space=vmem, size = 0x12000, scoped, tag = 'internal scratch']
  #allocation2 [shape = 'f32[2,32,128]{2,1,0:T(8,128)}', space=vmem, size = 0x8000, scoped, tag = 'scratch operand']
  #allocation3 [shape = 'f32[2,32,128]{2,1,0:T(8,128)}', space=vmem, size = 0x8000, scoped, tag = 'scratch operand']
  %s0 = inlined_call_operand.hbm [shape: f32[2,32,256], index: 0, kind: input, shape index: {}]
  %s1 = inlined_call_operand.vmem [shape: f32[32,32], index: 1, kind: input, shape index: {}]
  %s2 = inlined_call_operand.hbm [shape: f32[32,32], index: 2, kind: input, shape index: {}]
  %s3 = inlined_call_operand.vmem [shape: f32[32,2], index: 3, kind: input, shape index: {}]
  %s4 = inlined_call_operand.vmem [shape: f32[2,32], index: 4, kind: input, shape index: {}]
  %s5 = inlined_call_operand.hbm [shape: f32[2,32], index: 5, kind: output, shape index: {}]
  %s6 = sld [smem:[#allocation0]]
  $region46: #{tpu_custom_call.1} parent=0
    _
  %s8 = ssub.s32 1, %s6
  %s9 = scalar_select 0, %s8, %s6
  $region1: #{tpu_custom_call.1} parent=0
    #allocation4 [shape = 'u8[65536]{0}', space=vmem, size = 0x10000, scoped, tag = 'input window, operand 0, single buffered']
    #allocation5 [shape = 's32[1]{0}', space=sflag, size = 0x4, scoped, tag = 'scoped memory for tpu_custom_call.1']
    #allocation6 [shape = 's32[1]{0}', space=sflag, size = 0x4, scoped, tag = 'scoped memory for tpu_custom_call.1']
    #allocation7 [shape = 'u8[16384]{0}', space=vmem, size = 0x4000, scoped, tag = 'input window, operand 2, single buffered']
    #allocation8 [shape = 's32[1]{0}', space=sflag, size = 0x4, scoped, tag = 'scoped memory for tpu_custom_call.1']
    #allocation9 [shape = 'u8[1024]{0}', space=vmem, size = 0x400, scoped, tag = 'output window, operand 0, single buffered']
    %10 = vsyncpa [#allocation5], 0
    %11 = vsyncpa [#allocation8], 0
    %12 = vsyncpa [#allocation6], 0
    // Predicated region
    $region2: #{tpu_custom_call.1} parent=1 // pred_check
      _
    $region3: #{tpu_custom_call.1} parent=1 // pred_check_branch
      %14 = sbr.rel (0) target = $region5
    $region4: #{tpu_custom_call.1} parent=1 // pred_region
      %s16 = ssub.s32 2048, 2048
      %17 = vsyncadd [#allocation5], %s16
      %s18 = sshll.u32 [#allocation4], 4
      %s19 = int_to_ptr.vmem [resolvable:$true] %s18
      %24 = dma.hbm_to_vmem [thread:$0]  %s0, 2048, %s19, [#allocation5], 256, 256, 16
    $region5: #{tpu_custom_call.1} parent=1 // pred_fallthru
      _
    // Predicated region
    $region6: #{tpu_custom_call.1} parent=1 // pred_check
      _
    $region7: #{tpu_custom_call.1} parent=1 // pred_check_branch
      %26 = sbr.rel (0) target = $region9
    $region8: #{tpu_custom_call.1} parent=1 // pred_region
      _
    $region9: #{tpu_custom_call.1} parent=1 // pred_fallthru
      _
    // Predicated region
    $region10: #{tpu_custom_call.1} parent=1 // pred_check
      _
    $region11: #{tpu_custom_call.1} parent=1 // pred_check_branch
      %28 = sbr.rel (0) target = $region13
    $region12: #{tpu_custom_call.1} parent=1 // pred_region
      %s30 = ssub.s32 512, 512
      %31 = vsyncadd [#allocation8], %s30
      %s32 = sshll.u32 [#allocation7], 4
      %s33 = int_to_ptr.vmem [resolvable:$true] %s32
      %38 = dma.hbm_to_vmem [thread:$0]  %s2, 512, %s33, [#allocation8], 128, 128, 8
    $region13: #{tpu_custom_call.1} parent=1 // pred_fallthru
      _
    // Predicated region
    $region14: #{tpu_custom_call.1} parent=1 // pred_check
      _
    $region15: #{tpu_custom_call.1} parent=1 // pred_check_branch
      %40 = sbr.rel (0) target = $region17
    $region16: #{tpu_custom_call.1} parent=1 // pred_region
      _
    $region17: #{tpu_custom_call.1} parent=1 // pred_fallthru
      _
    // Predicated region
    $region18: #{tpu_custom_call.1} parent=1 // pred_check
      _
    $region19: #{tpu_custom_call.1} parent=1 // pred_check_branch
      %42 = sbr.rel (0) target = $region21
    $region20: #{tpu_custom_call.1} parent=1 // pred_region
      _
    $region21: #{tpu_custom_call.1} parent=1 // pred_fallthru
      _
    // Predicated region
    $region22: #{tpu_custom_call.1} parent=1 // pred_check
      _
    $region23: #{tpu_custom_call.1} parent=1 // pred_check_branch
      %44 = sbr.rel (0) target = $region25
    $region24: #{tpu_custom_call.1} parent=1 // pred_region
      %45 = dma.done [#allocation5], 2048
    $region25: #{tpu_custom_call.1} parent=1 // pred_fallthru
      _
    // Predicated region
    $region26: #{tpu_custom_call.1} parent=1 // pred_check
      _
    $region27: #{tpu_custom_call.1} parent=1 // pred_check_branch
      %47 = sbr.rel (0) target = $region29
    $region28: #{tpu_custom_call.1} parent=1 // pred_region
      %48 = dma.done [#allocation8], 512
    $region29: #{tpu_custom_call.1} parent=1 // pred_fallthru
      _
    %p49 = scmp.eq.s32.totalorder 0, 0
    // Predicated region
    $region30: #{tpu_custom_call.1} parent=1 // pred_check
      %p50 = pneg %p49
    $region31: #{tpu_custom_call.1} parent=1 // pred_check_branch
      %52 = sbr.rel (%p50) target = $region33
    $region32: #{tpu_custom_call.1} parent=1 // pred_region
      %53 = vst [vmem:[#allocation2] sm:$0xff] 0.0
      %54 = vst [vmem:[#allocation2 + $0x8] sm:$0xff] 0.0
      %55 = vst [vmem:[#allocation2 + $0x10] sm:$0xff] 0.0
      %56 = vst [vmem:[#allocation2 + $0x18] sm:$0xff] 0.0
      %57 = vst [vmem:[#allocation2 + $0x20] sm:$0xff] 0.0
      %58 = vst [vmem:[#allocation2 + $0x28] sm:$0xff] 0.0
      %59 = vst [vmem:[#allocation2 + $0x30] sm:$0xff] 0.0
      %60 = vst [vmem:[#allocation2 + $0x38] sm:$0xff] 0.0
      %61 = vst [vmem:[#allocation3] sm:$0xff] -inf
      %62 = vst [vmem:[#allocation3 + $0x8] sm:$0xff] -inf
      %63 = vst [vmem:[#allocation3 + $0x10] sm:$0xff] -inf
      %64 = vst [vmem:[#allocation3 + $0x18] sm:$0xff] -inf
      %65 = vst [vmem:[#allocation3 + $0x20] sm:$0xff] -inf
      %66 = vst [vmem:[#allocation3 + $0x28] sm:$0xff] -inf
      %67 = vst [vmem:[#allocation3 + $0x30] sm:$0xff] -inf
      %68 = vst [vmem:[#allocation3 + $0x38] sm:$0xff] -inf
    $region33: #{tpu_custom_call.1} parent=1 // pred_fallthru
      _
    %v69 = vld [vmem:[#allocation4] sm:$0xff]
    %v70 = vld [vmem:[#allocation4 + $0x8] sm:$0xff]
    %v71 = vld [vmem:[#allocation4 + $0x10] sm:$0xff]
    %v72 = vld [vmem:[#allocation4 + $0x18] sm:$0xff]
    %v73 = vld [vmem:[#allocation4 + $0x20] sm:$0xff]
    %v74 = vld [vmem:[#allocation4 + $0x28] sm:$0xff]
    %v75 = vld [vmem:[#allocation4 + $0x30] sm:$0xff]
    %v76 = vld [vmem:[#allocation4 + $0x38] sm:$0xff]
    %v77 = vld [vmem:[#allocation4 + $0x40] sm:$0xff]
    %v78 = vld [vmem:[#allocation4 + $0x48] sm:$0xff]
    %v79 = vld [vmem:[#allocation4 + $0x50] sm:$0xff]
    %v80 = vld [vmem:[#allocation4 + $0x58] sm:$0xff]
    %v81 = vld [vmem:[#allocation4 + $0x60] sm:$0xff]
    %v82 = vld [vmem:[#allocation4 + $0x68] sm:$0xff]
    %v83 = vld [vmem:[#allocation4 + $0x70] sm:$0xff]
    %v84 = vld [vmem:[#allocation4 + $0x78] sm:$0xff]
    %v85 = vadd.f32 %v69, %v70
    %v86 = vadd.f32 %v71, %v72
    %v87 = vadd.f32 %v73, %v74
    %v88 = vadd.f32 %v75, %v76
    %v89 = vadd.f32 %v77, %v78
    %v90 = vadd.f32 %v79, %v80
    %v91 = vadd.f32 %v81, %v82
    %v92 = vadd.f32 %v83, %v84
    %v93 = vmax.f32 %v69, %v70
    %v94 = vmax.f32 %v71, %v72
    %v95 = vmax.f32 %v73, %v74
    %v96 = vmax.f32 %v75, %v76
    %v97 = vmax.f32 %v77, %v78
    %v98 = vmax.f32 %v79, %v80
    %v99 = vmax.f32 %v81, %v82
    %v100 = vmax.f32 %v83, %v84
    %v101 = vld [vmem:[#allocation2] sm:$0xff]
    %v102 = vld [vmem:[#allocation2 + $0x8] sm:$0xff]
    %v103 = vld [vmem:[#allocation2 + $0x10] sm:$0xff]
    %v104 = vld [vmem:[#allocation2 + $0x18] sm:$0xff]
    %v105 = vld [vmem:[#allocation2 + $0x20] sm:$0xff]
    %v106 = vld [vmem:[#allocation2 + $0x28] sm:$0xff]
    %v107 = vld [vmem:[#allocation2 + $0x30] sm:$0xff]
    %v108 = vld [vmem:[#allocation2 + $0x38] sm:$0xff]
    %v109 = vadd.f32 %v101, %v85
    %v110 = vadd.f32 %v102, %v86
    %v111 = vadd.f32 %v103, %v87
    %v112 = vadd.f32 %v104, %v88
    %v113 = vadd.f32 %v105, %v89
    %v114 = vadd.f32 %v106, %v90
    %v115 = vadd.f32 %v107, %v91
    %v116 = vadd.f32 %v108, %v92
    %117 = vst [vmem:[#allocation2] sm:$0xff] %v109
    %118 = vst [vmem:[#allocation2 + $0x8] sm:$0xff] %v110
    %119 = vst [vmem:[#allocation2 + $0x10] sm:$0xff] %v111
    %120 = vst [vmem:[#allocation2 + $0x18] sm:$0xff] %v112
    %121 = vst [vmem:[#allocation2 + $0x20] sm:$0xff] %v113
    %122 = vst [vmem:[#allocation2 + $0x28] sm:$0xff] %v114
    %123 = vst [vmem:[#allocation2 + $0x30] sm:$0xff] %v115
    %124 = vst [vmem:[#allocation2 + $0x38] sm:$0xff] %v116
    %v125 = vld [vmem:[#allocation3] sm:$0xff]
    %v126 = vld [vmem:[#allocation3 + $0x8] sm:$0xff]
    %v127 = vld [vmem:[#allocation3 + $0x10] sm:$0xff]
    %v128 = vld [vmem:[#allocation3 + $0x18] sm:$0xff]
    %v129 = vld [vmem:[#allocation3 + $0x20] sm:$0xff]
    %v130 = vld [vmem:[#allocation3 + $0x28] sm:$0xff]
    %v131 = vld [vmem:[#allocation3 + $0x30] sm:$0xff]
    %v132 = vld [vmem:[#allocation3 + $0x38] sm:$0xff]
    %v133 = vmax.f32 %v125, %v93
    %v134 = vmax.f32 %v126, %v94
    %v135 = vmax.f32 %v127, %v95
    %v136 = vmax.f32 %v128, %v96
    %v137 = vmax.f32 %v129, %v97
    %v138 = vmax.f32 %v130, %v98
    %v139 = vmax.f32 %v131, %v99
    %v140 = vmax.f32 %v132, %v100
    %141 = vst [vmem:[#allocation3] sm:$0xff] %v133
    %142 = vst [vmem:[#allocation3 + $0x8] sm:$0xff] %v134
    %143 = vst [vmem:[#allocation3 + $0x10] sm:$0xff] %v135
    %144 = vst [vmem:[#allocation3 + $0x18] sm:$0xff] %v136
    %145 = vst [vmem:[#allocation3 + $0x20] sm:$0xff] %v137
    %146 = vst [vmem:[#allocation3 + $0x28] sm:$0xff] %v138
    %147 = vst [vmem:[#allocation3 + $0x30] sm:$0xff] %v139
    %148 = vst [vmem:[#allocation3 + $0x38] sm:$0xff] %v140
    // Predicated region
    $region34: #{tpu_custom_call.1} parent=1 // pred_check
      %p149 = pneg %p49
    $region35: #{tpu_custom_call.1} parent=1 // pred_check_branch
      %151 = sbr.rel (%p149) target = $region37
    $region36: #{tpu_custom_call.1} parent=1 // pred_region
      %v152 = vld [vmem:[#allocation2] sm:$0xff]
      %v153 = vld [vmem:[#allocation2 + $0x8] sm:$0xff]
      %v154 = vld [vmem:[#allocation2 + $0x10] sm:$0xff]
      %v155 = vld [vmem:[#allocation2 + $0x18] sm:$0xff]
      %v156 = vld [vmem:[#allocation2 + $0x20] sm:$0xff]
      %v157 = vld [vmem:[#allocation2 + $0x28] sm:$0xff]
      %v158 = vld [vmem:[#allocation2 + $0x30] sm:$0xff]
      %v159 = vld [vmem:[#allocation2 + $0x38] sm:$0xff]
      %160 = vadd.xlane.f32.xlu0 %v152
      %v161 = vpop.xlane.xlu0 %160
      %162 = vadd.xlane.f32.xlu0 %v153
      %v163 = vpop.xlane.xlu0 %162
      %164 = vadd.xlane.f32.xlu0 %v154
      %v165 = vpop.xlane.xlu0 %164
      %166 = vadd.xlane.f32.xlu0 %v155
      %v167 = vpop.xlane.xlu0 %166
      %168 = vadd.xlane.f32.xlu0 %v156
      %v169 = vpop.xlane.xlu0 %168
      %170 = vadd.xlane.f32.xlu0 %v157
      %v171 = vpop.xlane.xlu0 %170
      %172 = vadd.xlane.f32.xlu0 %v158
      %v173 = vpop.xlane.xlu0 %172
      %174 = vadd.xlane.f32.xlu0 %v159
      %v175 = vpop.xlane.xlu0 %174
      %v176 = vld [vmem:[#allocation3] sm:$0xff]
      %v177 = vld [vmem:[#allocation3 + $0x8] sm:$0xff]
      %v178 = vld [vmem:[#allocation3 + $0x10] sm:$0xff]
      %v179 = vld [vmem:[#allocation3 + $0x18] sm:$0xff]
      %v180 = vld [vmem:[#allocation3 + $0x20] sm:$0xff]
      %v181 = vld [vmem:[#allocation3 + $0x28] sm:$0xff]
      %v182 = vld [vmem:[#allocation3 + $0x30] sm:$0xff]
      %v183 = vld [vmem:[#allocation3 + $0x38] sm:$0xff]
      %184 = vmax.xlane.f32.xlu0 %v176
      %v185 = vpop.xlane.xlu0 %184
      %186 = vmax.xlane.f32.xlu0 %v177
      %v187 = vpop.xlane.xlu0 %186
      %188 = vmax.xlane.f32.xlu0 %v178
      %v189 = vpop.xlane.xlu0 %188
      %190 = vmax.xlane.f32.xlu0 %v179
      %v191 = vpop.xlane.xlu0 %190
      %192 = vmax.xlane.f32.xlu0 %v180
      %v193 = vpop.xlane.xlu0 %192
      %194 = vmax.xlane.f32.xlu0 %v181
      %v195 = vpop.xlane.xlu0 %194
      %196 = vmax.xlane.f32.xlu0 %v182
      %v197 = vpop.xlane.xlu0 %196
      %198 = vmax.xlane.f32.xlu0 %v183
      %v199 = vpop.xlane.xlu0 %198
      %v200 = vmul.f32 %v161, 0.00390625
      %v201 = vmul.f32 %v163, 0.00390625
      %v202 = vmul.f32 %v165, 0.00390625
      %v203 = vmul.f32 %v167, 0.00390625
      %v204 = vmul.f32 %v169, 0.00390625
      %v205 = vmul.f32 %v171, 0.00390625
      %v206 = vmul.f32 %v173, 0.00390625
      %v207 = vmul.f32 %v175, 0.00390625
      %v208 = vld [vmem:[%s1] sm:$0xff]
      %v209 = vld [vmem:[%s1 + $0x8] sm:$0xff]
      %v210 = vld [vmem:[%s1 + $0x10] sm:$0xff]
      %v211 = vld [vmem:[%s1 + $0x18] sm:$0xff]
      %v212 = vld [vmem:[#allocation7] sm:$0xff]
      %v213 = vld [vmem:[#allocation7 + $0x8] sm:$0xff]
      %v214 = vld [vmem:[#allocation7 + $0x10] sm:$0xff]
      %v215 = vld [vmem:[#allocation7 + $0x18] sm:$0xff]
      %v224 = vlaneseq
      %v225 = vand.u32 %v224, 127
      %v226 = vlaneseq
      %v227 = vshrl.u32 %v226, 7
      %v228 = vsub.s32 %v225, %v227
      %v229 = vrot.slane %v185, %v228
      %v230 = vadd.s32 %v225, 4294967288
      %v231 = vlaneseq
      %v232 = vshrl.u32 %v231, 7
      %v233 = vsub.s32 %v230, %v232
      %v234 = vrot.slane %v187, %v233
      %vm235 = vcmask 130112
      %v236 = vsel %vm235, %v234, %v229
      %v237 = vadd.s32 %v225, 4294967280
      %v238 = vlaneseq
      %v239 = vshrl.u32 %v238, 7
      %v240 = vsub.s32 %v237, %v239
      %v241 = vrot.slane %v189, %v240
      %vm242 = vcmask 195712
      %v243 = vsel %vm242, %v241, %v236
      %v244 = vadd.s32 %v225, 4294967272
      %v245 = vlaneseq
      %v246 = vshrl.u32 %v245, 7
      %v247 = vsub.s32 %v244, %v246
      %v248 = vrot.slane %v191, %v247
      %vm249 = vcmask 261312
      %v250 = vsel %vm249, %v248, %v243
      %v251 = vlaneseq
      %v252 = vshrl.u32 %v251, 7
      %v253 = vsub.s32 %v225, %v252
      %v254 = vrot.slane %v193, %v253
      %v255 = vlaneseq
      %v256 = vshrl.u32 %v255, 7
      %v257 = vsub.s32 %v230, %v256
      %v258 = vrot.slane %v195, %v257
      %v259 = vsel %vm235, %v258, %v254
      %v260 = vlaneseq
      %v261 = vshrl.u32 %v260, 7
      %v262 = vsub.s32 %v237, %v261
      %v263 = vrot.slane %v197, %v262
      %v264 = vsel %vm242, %v263, %v259
      %v265 = vlaneseq
      %v266 = vshrl.u32 %v265, 7
      %v267 = vsub.s32 %v244, %v266
      %v268 = vrot.slane %v199, %v267
      %v269 = vsel %vm249, %v268, %v264
      %vm270 = vcmask 1041409
      %v271 = vsel %vm270, %v269, %v250
      %vm272 = vcmask 261120
      %v273 = vsel %vm272, %v271, 0
      %275 = vmatprep.subr.mxu0 0.0
      %276 = vmatpush1.msra.mxu0 %v212
      %277 = vmatprep.subr.mxu0 0.0
      %278 = vmatpush1.msra.mxu0 %v213
      %279 = vmatprep.subr.mxu0 0.0
      %280 = vmatpush1.msra.mxu0 %v214
      %281 = vmatprep.subr.mxu0 0.0
      %282 = vmatpush1.msra.mxu0 %v215
      %283 = vmatprep.subr.mxu0 0.0
      %284 = vmatpush1.msra.mxu0 0.0
      %285 = vmatprep.subr.mxu0 0.0
      %286 = vmatpush1.msra.mxu0 0.0
      %287 = vmatprep.subr.mxu0 0.0
      %288 = vmatpush1.msra.mxu0 0.0
      %289 = vmatprep.subr.mxu0 0.0
      %290 = vmatpush1.msra.mxu0 0.0
      %291 = vmatprep.subr.mxu0 0.0
      %292 = vmatpush1.msra.mxu0 0.0
      %293 = vmatprep.subr.mxu0 0.0
      %294 = vmatpush1.msra.mxu0 0.0
      %295 = vmatprep.subr.mxu0 0.0
      %296 = vmatpush1.msra.mxu0 0.0
      %297 = vmatprep.subr.mxu0 0.0
      %298 = vmatpush1.msra.mxu0 0.0
      %299 = vmatprep.subr.mxu0 0.0
      %300 = vmatpush1.msra.mxu0 0.0
      %301 = vmatprep.subr.mxu0 0.0
      %302 = vmatpush1.msra.mxu0 0.0
      %303 = vmatprep.subr.mxu0 0.0
      %304 = vmatpush1.msra.mxu0 0.0
      %305 = vmatprep.subr.mxu0 0.0
      %306 = vmatpush1.msra.mxu0 0.0
      %307 = vmatprep.subr.mxu0 0.0
      %308 = vmatpush1.msra.mxu0 0.0
      %309 = vmatprep.subr.mxu0 0.0
      %310 = vmatpush1.msra.mxu0 0.0
      %311 = vmatprep.subr.mxu0 0.0
      %312 = vmatpush1.msra.mxu0 0.0
      %313 = vmatprep.subr.mxu0 0.0
      %314 = vmatpush1.msra.mxu0 0.0
      %315 = vmatprep.subr.mxu0 0.0
      %316 = vmatpush1.msra.mxu0 0.0
      %317 = vmatprep.subr.mxu0 0.0
      %318 = vmatpush1.msra.mxu0 0.0
      %319 = vmatprep.subr.mxu0 0.0
      %320 = vmatpush1.msra.mxu0 0.0
      %321 = vmatprep.subr.mxu0 0.0
      %322 = vmatpush1.msra.mxu0 0.0
      %323 = vmatprep.subr.mxu0 0.0
      %324 = vmatpush1.msra.mxu0 0.0
      %325 = vmatprep.subr.mxu0 0.0
      %326 = vmatpush1.msra.mxu0 0.0
      %327 = vmatprep.subr.mxu0 0.0
      %328 = vmatpush1.msra.mxu0 0.0
      %329 = vmatprep.subr.mxu0 0.0
      %330 = vmatpush1.msra.mxu0 0.0
      %331 = vmatprep.subr.mxu0 0.0
      %332 = vmatpush1.msra.mxu0 0.0
      %333 = vmatprep.subr.mxu0 0.0
      %334 = vmatpush1.msra.mxu0 0.0
      %335 = vmatprep.subr.mxu0 0.0
      %336 = vmatpush1.msra.mxu0 0.0
      %337 = vmatprep.subr.mxu0 0.0
      %338 = vmatpush1.msra.mxu0 0.0
      %339 = vmatprep.mubr.f32.mxu0 0.0
      %340 = vmatmul.mubr.f32.gmra.mrb[0].mxu0 %v273
      %v341 = vpop.f32.mrb[0].mxu0
      %v342 = vadd.f32 0.0, %v341
      %v343 = vpop.f32.mrb[0].mxu0
      %344 = vdwg.mxu0
      %v353 = vlaneseq
      %v354 = vshrl.u32 %v353, 7
      %v355 = vsub.s32 %v225, %v354
      %v356 = vrot.slane %v200, %v355
      %v357 = vlaneseq
      %v358 = vshrl.u32 %v357, 7
      %v359 = vsub.s32 %v230, %v358
      %v360 = vrot.slane %v201, %v359
      %v361 = vsel %vm235, %v360, %v356
      %v362 = vlaneseq
      %v363 = vshrl.u32 %v362, 7
      %v364 = vsub.s32 %v237, %v363
      %v365 = vrot.slane %v202, %v364
      %v366 = vsel %vm242, %v365, %v361
      %v367 = vlaneseq
      %v368 = vshrl.u32 %v367, 7
      %v369 = vsub.s32 %v244, %v368
      %v370 = vrot.slane %v203, %v369
      %v371 = vsel %vm249, %v370, %v366
      %v372 = vlaneseq
      %v373 = vshrl.u32 %v372, 7
      %v374 = vsub.s32 %v225, %v373
      %v375 = vrot.slane %v204, %v374
      %v376 = vlaneseq
      %v377 = vshrl.u32 %v376, 7
      %v378 = vsub.s32 %v230, %v377
      %v379 = vrot.slane %v205, %v378
      %v380 = vsel %vm235, %v379, %v375
      %v381 = vlaneseq
      %v382 = vshrl.u32 %v381, 7
      %v383 = vsub.s32 %v237, %v382
      %v384 = vrot.slane %v206, %v383
      %v385 = vsel %vm242, %v384, %v380
      %v386 = vlaneseq
      %v387 = vshrl.u32 %v386, 7
      %v388 = vsub.s32 %v244, %v387
      %v389 = vrot.slane %v207, %v388
      %v390 = vsel %vm249, %v389, %v385
      %v391 = vsel %vm270, %v390, %v371
      %v392 = vsel %vm272, %v391, 0
      %394 = vmatprep.subr.mxu0 0.0
      %395 = vmatpush1.msra.mxu0 %v208
      %396 = vmatprep.subr.mxu0 0.0
      %397 = vmatpush1.msra.mxu0 %v209
      %398 = vmatprep.subr.mxu0 0.0
      %399 = vmatpush1.msra.mxu0 %v210
      %400 = vmatprep.subr.mxu0 0.0
      %401 = vmatpush1.msra.mxu0 %v211
      %402 = vmatprep.subr.mxu0 0.0
      %403 = vmatpush1.msra.mxu0 0.0
      %404 = vmatprep.subr.mxu0 0.0
      %405 = vmatpush1.msra.mxu0 0.0
      %406 = vmatprep.subr.mxu0 0.0
      %407 = vmatpush1.msra.mxu0 0.0
      %408 = vmatprep.subr.mxu0 0.0
      %409 = vmatpush1.msra.mxu0 0.0
      %410 = vmatprep.subr.mxu0 0.0
      %411 = vmatpush1.msra.mxu0 0.0
      %412 = vmatprep.subr.mxu0 0.0
      %413 = vmatpush1.msra.mxu0 0.0
      %414 = vmatprep.subr.mxu0 0.0
      %415 = vmatpush1.msra.mxu0 0.0
      %416 = vmatprep.subr.mxu0 0.0
      %417 = vmatpush1.msra.mxu0 0.0
      %418 = vmatprep.subr.mxu0 0.0
      %419 = vmatpush1.msra.mxu0 0.0
      %420 = vmatprep.subr.mxu0 0.0
      %421 = vmatpush1.msra.mxu0 0.0
      %422 = vmatprep.subr.mxu0 0.0
      %423 = vmatpush1.msra.mxu0 0.0
      %424 = vmatprep.subr.mxu0 0.0
      %425 = vmatpush1.msra.mxu0 0.0
      %426 = vmatprep.subr.mxu0 0.0
      %427 = vmatpush1.msra.mxu0 0.0
      %428 = vmatprep.subr.mxu0 0.0
      %429 = vmatpush1.msra.mxu0 0.0
      %430 = vmatprep.subr.mxu0 0.0
      %431 = vmatpush1.msra.mxu0 0.0
      %432 = vmatprep.subr.mxu0 0.0
      %433 = vmatpush1.msra.mxu0 0.0
      %434 = vmatprep.subr.mxu0 0.0
      %435 = vmatpush1.msra.mxu0 0.0
      %436 = vmatprep.subr.mxu0 0.0
      %437 = vmatpush1.msra.mxu0 0.0
      %438 = vmatprep.subr.mxu0 0.0
      %439 = vmatpush1.msra.mxu0 0.0
      %440 = vmatprep.subr.mxu0 0.0
      %441 = vmatpush1.msra.mxu0 0.0
      %442 = vmatprep.subr.mxu0 0.0
      %443 = vmatpush1.msra.mxu0 0.0
      %444 = vmatprep.subr.mxu0 0.0
      %445 = vmatpush1.msra.mxu0 0.0
      %446 = vmatprep.subr.mxu0 0.0
      %447 = vmatpush1.msra.mxu0 0.0
      %448 = vmatprep.subr.mxu0 0.0
      %449 = vmatpush1.msra.mxu0 0.0
      %450 = vmatprep.subr.mxu0 0.0
      %451 = vmatpush1.msra.mxu0 0.0
      %452 = vmatprep.subr.mxu0 0.0
      %453 = vmatpush1.msra.mxu0 0.0
      %454 = vmatprep.subr.mxu0 0.0
      %455 = vmatpush1.msra.mxu0 0.0
      %456 = vmatprep.subr.mxu0 0.0
      %457 = vmatpush1.msra.mxu0 0.0
      %458 = vmatprep.mubr.f32.mxu0 0.0
      %459 = vmatmul.mubr.f32.gmra.mrb[0].mxu0 %v392
      %v460 = vpop.f32.mrb[0].mxu0
      %v461 = vadd.f32 %v342, %v460
      %v462 = vpop.f32.mrb[0].mxu0
      %463 = vdwg.mxu0
      %v464 = vld [vmem:[%s3] sm:$0xff]
      %v465 = vld [vmem:[%s3 + $0x8] sm:$0xff]
      %v466 = vld [vmem:[%s3 + $0x10] sm:$0xff]
      %v467 = vld [vmem:[%s3 + $0x18] sm:$0xff]
      %v469 = vsel %vm272, %v461, 0
      %471 = vmatprep.subr.mxu0 0.0
      %472 = vmatpush1.msra.mxu0 %v464
      %473 = vmatprep.subr.mxu0 0.0
      %474 = vmatpush1.msra.mxu0 %v465
      %475 = vmatprep.subr.mxu0 0.0
      %476 = vmatpush1.msra.mxu0 %v466
      %477 = vmatprep.subr.mxu0 0.0
      %478 = vmatpush1.msra.mxu0 %v467
      %479 = vmatprep.subr.mxu0 0.0
      %480 = vmatpush1.msra.mxu0 0.0
      %481 = vmatprep.subr.mxu0 0.0
      %482 = vmatpush1.msra.mxu0 0.0
      %483 = vmatprep.subr.mxu0 0.0
      %484 = vmatpush1.msra.mxu0 0.0
      %485 = vmatprep.subr.mxu0 0.0
      %486 = vmatpush1.msra.mxu0 0.0
      %487 = vmatprep.subr.mxu0 0.0
      %488 = vmatpush1.msra.mxu0 0.0
      %489 = vmatprep.subr.mxu0 0.0
      %490 = vmatpush1.msra.mxu0 0.0
      %491 = vmatprep.subr.mxu0 0.0
      %492 = vmatpush1.msra.mxu0 0.0
      %493 = vmatprep.subr.mxu0 0.0
      %494 = vmatpush1.msra.mxu0 0.0
      %495 = vmatprep.subr.mxu0 0.0
      %496 = vmatpush1.msra.mxu0 0.0
      %497 = vmatprep.subr.mxu0 0.0
      %498 = vmatpush1.msra.mxu0 0.0
      %499 = vmatprep.subr.mxu0 0.0
      %500 = vmatpush1.msra.mxu0 0.0
      %501 = vmatprep.subr.mxu0 0.0
      %502 = vmatpush1.msra.mxu0 0.0
      %503 = vmatprep.subr.mxu0 0.0
      %504 = vmatpush1.msra.mxu0 0.0
      %505 = vmatprep.subr.mxu0 0.0
      %506 = vmatpush1.msra.mxu0 0.0
      %507 = vmatprep.subr.mxu0 0.0
      %508 = vmatpush1.msra.mxu0 0.0
      %509 = vmatprep.subr.mxu0 0.0
      %510 = vmatpush1.msra.mxu0 0.0
      %511 = vmatprep.subr.mxu0 0.0
      %512 = vmatpush1.msra.mxu0 0.0
      %513 = vmatprep.subr.mxu0 0.0
      %514 = vmatpush1.msra.mxu0 0.0
      %515 = vmatprep.subr.mxu0 0.0
      %516 = vmatpush1.msra.mxu0 0.0
      %517 = vmatprep.subr.mxu0 0.0
      %518 = vmatpush1.msra.mxu0 0.0
      %519 = vmatprep.subr.mxu0 0.0
      %520 = vmatpush1.msra.mxu0 0.0
      %521 = vmatprep.subr.mxu0 0.0
      %522 = vmatpush1.msra.mxu0 0.0
      %523 = vmatprep.subr.mxu0 0.0
      %524 = vmatpush1.msra.mxu0 0.0
      %525 = vmatprep.subr.mxu0 0.0
      %526 = vmatpush1.msra.mxu0 0.0
      %527 = vmatprep.subr.mxu0 0.0
      %528 = vmatpush1.msra.mxu0 0.0
      %529 = vmatprep.subr.mxu0 0.0
      %530 = vmatpush1.msra.mxu0 0.0
      %531 = vmatprep.subr.mxu0 0.0
      %532 = vmatpush1.msra.mxu0 0.0
      %533 = vmatprep.subr.mxu0 0.0
      %534 = vmatpush1.msra.mxu0 0.0
      %535 = vmatprep.mubr.f32.mxu0 0.0
      %536 = vmatmul.mubr.f32.gmra.mrb[0].mxu0 %v469
      %v537 = vpop.f32.mrb[0].mxu0
      %v538 = vadd.f32 0.0, %v537
      %v539 = vpop.f32.mrb[0].mxu0
      %540 = vdwg.mxu0
      %v541 = vmax.f32 %v538, 0.0
      %v542 = vld [vmem:[%s4] sm:$0x3]
      %vm543 = vcmask 15360
      %v545 = vsel %vm543, %v541, 0
      %vm547 = vcmask 1041408
      %v549 = vsel %vm547, %v542, 0
      %551 = vmatprep.subr.mxu0 0.0
      %552 = vmatpush1.msra.mxu0 %v549
      %553 = vmatprep.subr.mxu0 0.0
      %554 = vmatpush1.msra.mxu0 0.0
      %555 = vmatprep.subr.mxu0 0.0
      %556 = vmatpush1.msra.mxu0 0.0
      %557 = vmatprep.subr.mxu0 0.0
      %558 = vmatpush1.msra.mxu0 0.0
      %559 = vmatprep.subr.mxu0 0.0
      %560 = vmatpush1.msra.mxu0 0.0
      %561 = vmatprep.subr.mxu0 0.0
      %562 = vmatpush1.msra.mxu0 0.0
      %563 = vmatprep.subr.mxu0 0.0
      %564 = vmatpush1.msra.mxu0 0.0
      %565 = vmatprep.subr.mxu0 0.0
      %566 = vmatpush1.msra.mxu0 0.0
      %567 = vmatprep.subr.mxu0 0.0
      %568 = vmatpush1.msra.mxu0 0.0
      %569 = vmatprep.subr.mxu0 0.0
      %570 = vmatpush1.msra.mxu0 0.0
      %571 = vmatprep.subr.mxu0 0.0
      %572 = vmatpush1.msra.mxu0 0.0
      %573 = vmatprep.subr.mxu0 0.0
      %574 = vmatpush1.msra.mxu0 0.0
      %575 = vmatprep.subr.mxu0 0.0
      %576 = vmatpush1.msra.mxu0 0.0
      %577 = vmatprep.subr.mxu0 0.0
      %578 = vmatpush1.msra.mxu0 0.0
      %579 = vmatprep.subr.mxu0 0.0
      %580 = vmatpush1.msra.mxu0 0.0
      %581 = vmatprep.subr.mxu0 0.0
      %582 = vmatpush1.msra.mxu0 0.0
      %583 = vmatprep.subr.mxu0 0.0
      %584 = vmatpush1.msra.mxu0 0.0
      %585 = vmatprep.subr.mxu0 0.0
      %586 = vmatpush1.msra.mxu0 0.0
      %587 = vmatprep.subr.mxu0 0.0
      %588 = vmatpush1.msra.mxu0 0.0
      %589 = vmatprep.subr.mxu0 0.0
      %590 = vmatpush1.msra.mxu0 0.0
      %591 = vmatprep.subr.mxu0 0.0
      %592 = vmatpush1.msra.mxu0 0.0
      %593 = vmatprep.subr.mxu0 0.0
      %594 = vmatpush1.msra.mxu0 0.0
      %595 = vmatprep.subr.mxu0 0.0
      %596 = vmatpush1.msra.mxu0 0.0
      %597 = vmatprep.subr.mxu0 0.0
      %598 = vmatpush1.msra.mxu0 0.0
      %599 = vmatprep.subr.mxu0 0.0
      %600 = vmatpush1.msra.mxu0 0.0
      %601 = vmatprep.subr.mxu0 0.0
      %602 = vmatpush1.msra.mxu0 0.0
      %603 = vmatprep.subr.mxu0 0.0
      %604 = vmatpush1.msra.mxu0 0.0
      %605 = vmatprep.subr.mxu0 0.0
      %606 = vmatpush1.msra.mxu0 0.0
      %607 = vmatprep.subr.mxu0 0.0
      %608 = vmatpush1.msra.mxu0 0.0
      %609 = vmatprep.subr.mxu0 0.0
      %610 = vmatpush1.msra.mxu0 0.0
      %611 = vmatprep.subr.mxu0 0.0
      %612 = vmatpush1.msra.mxu0 0.0
      %613 = vmatprep.subr.mxu0 0.0
      %614 = vmatpush1.msra.mxu0 0.0
      %615 = vmatprep.mubr.f32.mxu0 0.0
      %616 = vmatmul.mubr.f32.gmra.mrb[0].mxu0 %v545
      %v617 = vpop.f32.mrb[0].mxu0
      %v618 = vadd.f32 0.0, %v617
      %v619 = vpop.f32.mrb[0].mxu0
      %620 = vdwg.mxu0
      %v621 = vxor.u32 %v618, 2147483648
      %v622 = vmul.f32 %v621, 1.442695
      %v623 = vpow.pop %v622
      %v624 = vadd.f32 %v623, 1.0
      %v625 = vrcp.pop %v624
      %v626 = vmul.f32 1.0, %v625
      %vm627 = vcmask 254976
      %628 = vst.msk [vmem:[#allocation9] sm:$0x3] %vm627, %v626
    $region37: #{tpu_custom_call.1} parent=1 // pred_fallthru
      _
    // Predicated region
    $region38: #{tpu_custom_call.1} parent=1 // pred_check
      _
    $region39: #{tpu_custom_call.1} parent=1 // pred_check_branch
      %630 = sbr.rel (0) target = $region41
    $region40: #{tpu_custom_call.1} parent=1 // pred_region
      %s632 = ssub.s32 32, 32
      %633 = vsyncadd [#allocation6], %s632
      %s635 = sshll.u32 [#allocation9], 4
      %s636 = int_to_ptr.vmem [resolvable:$true] %s635
      %638 = dma.vmem_to_hbm [thread:$0]  %s636, 32, %s5, [#allocation6]
    $region41: #{tpu_custom_call.1} parent=1 // pred_fallthru
      _
    // Predicated region
    $region42: #{tpu_custom_call.1} parent=1 // pred_check
      _
    $region43: #{tpu_custom_call.1} parent=1 // pred_check_branch
      %640 = sbr.rel (0) target = $region45
    $region44: #{tpu_custom_call.1} parent=1 // pred_region
      %641 = dma.done [#allocation6], 32
    $region45: #{tpu_custom_call.1} parent=1 // pred_fallthru
      _
    %642 = vsyncpa [#allocation5], 1
    %643 = vsyncpa [#allocation8], 1
    %644 = vsyncpa [#allocation6], 1

</llo_original>
